<compile_context>
chip_gen: v7x
topology: tpu7x:2x2x1
jax: 0.10.0
libtpu: 0.0.40
codegen_flags: <defaults>
</compile_context>

<pallas_src>
import functools

import jax
import jax.numpy as jnp
from jax import lax
from jax.experimental import pallas as pl
from jax.experimental.pallas import tpu as pltpu


def _self_attention_kernel(x_ref, w_ref, b_ref, o_ref,
                           f_sc, g_sc, h_sc, *, ch_out, tile_j):
    j = pl.program_id(1)

    # Once per batch element: one fused projection matmul
    #   [f; g; h] = W_all @ x + b_all   -> (2*ch_out + C, N), kept in scratch.
    @pl.when(j == 0)
    def _():
        x = x_ref[0]  # (C, N)
        fgh = (jnp.dot(w_ref[...], x, preferred_element_type=jnp.float32)
               + b_ref[...])
        f_sc[...] = fgh[0:ch_out, :]
        g_sc[...] = fgh[ch_out:2 * ch_out, :]
        h_sc[...] = fgh[2 * ch_out:, :]

    # Per j-tile attention.
    start = pl.multiple_of(j * tile_j, tile_j)
    g_tile = g_sc[:, pl.ds(start, tile_j)]                     # (ch_out, TJ)

    # s[i, j] = sum_k f[k, i] * g[k, j]  -- dim-0 contraction, no transpose.
    s = lax.dot_general(f_sc[...], g_tile,
                        dimension_numbers=(((0,), (0,)), ((), ())),
                        preferred_element_type=jnp.float32)    # (N, TJ)

    # Softmax over axis 0 (== torch.softmax(s, dim=1) on (B, N, N)).
    s_max = jnp.max(s, axis=0, keepdims=True)                  # (1, TJ)
    p = jnp.exp(s - s_max)                                     # (N, TJ)
    denom = jnp.sum(p, axis=0, keepdims=True)                  # (1, TJ)
    # Reciprocal of the small (1, TJ) vector + broadcast multiply, instead of
    # an (N, TJ) divide.  Use approx=True for extra speed if tolerance allows.
    beta = p * pl.reciprocal(denom, approx=False)

    # o[c, j] = sum_i h[c, i] * beta[i, j]; write straight into the out tile.
    o_ref[0] = jnp.dot(h_sc[...], beta,
                       preferred_element_type=jnp.float32).astype(o_ref.dtype)


def _pick_tile_j(n):
    """Largest lane-dense column tile (multiple of 128) dividing n."""
    if n % 128 != 0:
        return n  # single full-extent tile; (8,128) rule satisfied via full dim
    for tj in (512, 256, 128):
        if n % tj == 0:
            return tj
    return 128


def self_attention_pallas(x, wf, bf, wg, bg, wh, bh):
    """x: (B, C, H, W) float32. Returns (B, C, H, W)."""
    B, C, H, W = x.shape
    N = H * W
    ch_out = wf.shape[0]
    R = 2 * ch_out + C

    TJ = _pick_tile_j(N)
    n_j = N // TJ

    x_flat = x.reshape(B, C, N)
    # Fuse the three 1x1-conv weight matrices / biases into one GEMM operand.
    w_all = jnp.concatenate([wf, wg, wh], axis=0)                 # (R, C)
    b_all = jnp.concatenate([bf, bg, bh], axis=0).reshape(R, 1)   # (R, 1)

    kernel = functools.partial(_self_attention_kernel,
                               ch_out=ch_out, tile_j=TJ)

    # Advisory cost estimate for the XLA scheduler.
    flops = B * (2 * R * C * N + 4 * C * N * N + 5 * N * N)
    cost = pl.CostEstimate(flops=flops,
                           transcendentals=B * N * N,
                           bytes_accessed=2 * B * C * N * 4 + R * (C + 1) * 4)

    # Rough VMEM need: double-buffered x/out blocks + fgh scratch + (N, TJ)
    # score/exp/beta temporaries; clamp to stay under v7x's 64 MiB physical.
    vmem_est = (2 * C * N + 2 * C * TJ + R * N + 4 * N * TJ) * 4 + (1 << 20)
    vmem_limit = min(max(vmem_est, 32 * 1024 * 1024), 64 * 1024 * 1024)

    out_flat = pl.pallas_call(
        kernel,
        out_shape=jax.ShapeDtypeStruct((B, C, N), x.dtype),
        grid_spec=pltpu.PrefetchScalarGridSpec(
            num_scalar_prefetch=0,
            grid=(B, n_j),
            in_specs=[
                pl.BlockSpec((1, C, N), lambda b, j: (b, 0, 0)),
                pl.BlockSpec((R, C), lambda b, j: (0, 0)),
                pl.BlockSpec((R, 1), lambda b, j: (0, 0)),
            ],
            out_specs=pl.BlockSpec((1, C, TJ), lambda b, j: (b, 0, j)),
            scratch_shapes=[
                pltpu.VMEM((ch_out, N), jnp.float32),  # f
                pltpu.VMEM((ch_out, N), jnp.float32),  # g
                pltpu.VMEM((C, N), jnp.float32),       # h
            ],
        ),
        compiler_params=pltpu.CompilerParams(
            dimension_semantics=("parallel", "arbitrary"),
            vmem_limit_bytes=vmem_limit,
        ),
        cost_estimate=cost,
    )(x_flat, w_all, b_all)

    return out_flat.reshape(B, C, H, W)


def self_attention_ref(x, wf, bf, wg, bg, wh, bh):
    """Pure-JAX reference matching the PyTorch forward."""
    B, C, H, W = x.shape
    N = H * W
    hi = lax.Precision.HIGHEST
    xf = x.reshape(B, C, N)
    f = jnp.einsum("oc,bcn->bon", wf, xf, precision=hi) + bf[None, :, None]
    g = jnp.einsum("oc,bcn->bon", wg, xf, precision=hi) + bg[None, :, None]
    h = jnp.einsum("oc,bcn->bon", wh, xf, precision=hi) + bh[None, :, None]
    s = jnp.einsum("bki,bkj->bij", f, g, precision=hi)    # (B, N, N)
    beta = jax.nn.softmax(s, axis=1)                      # torch dim=1
    o = jnp.einsum("bci,bij->bcj", h, beta, precision=hi)
    return o.reshape(B, C, H, W)


def _run_case(key, B, C_IN, C_OUT, H, W):
    kx, kwf, kbf, kwg, kbg, kwh, kbh = jax.random.split(key, 7)
    x = jax.random.normal(kx, (B, C_IN, H, W), dtype=jnp.float32)
    wf = jax.random.normal(kwf, (C_OUT, C_IN), dtype=jnp.float32) * 0.2
    bf = jax.random.normal(kbf, (C_OUT,), dtype=jnp.float32) * 0.1
    wg = jax.random.normal(kwg, (C_OUT, C_IN), dtype=jnp.float32) * 0.2
    bg = jax.random.normal(kbg, (C_OUT,), dtype=jnp.float32) * 0.1
    wh = jax.random.normal(kwh, (C_IN, C_IN), dtype=jnp.float32) * 0.2
    bh = jax.random.normal(kbh, (C_IN,), dtype=jnp.float32) * 0.1

    out = jax.block_until_ready(self_attention_pallas(x, wf, bf, wg, bg, wh, bh))
    ref = self_attention_ref(x, wf, bf, wg, bg, wh, bh)
    assert out.shape == (B, C_IN, H, W)
    assert jnp.allclose(out, ref, atol=1e-4, rtol=1e-4), (
        float(jnp.max(jnp.abs(out - ref))))


if __name__ == "__main__":
    key = jax.random.PRNGKey(0)
    k0, k1 = jax.random.split(key)
    # Primary case: single j-tile.
    _run_case(k0, B=2, C_IN=4, C_OUT=4, H=16, W=16)
    # Secondary case: N=1024 -> TJ=512 (exercises the multi-tile / scratch path).
    _run_case(k1, B=2, C_IN=4, C_OUT=4, H=32, W=32)
    print("KERNEL_OK")
</pallas_src>

<mosaic_0001>
module attributes {stable_mosaic.version = 11 : i64} {
  func.func @_self_attention_kernel(%arg0: i32, %arg1: i32, %arg2: memref<1x4x256xf32, #tpu.memory_space<vmem>>, %arg3: memref<12x4xf32, #tpu.memory_space<vmem>>, %arg4: memref<12x1xf32, #tpu.memory_space<vmem>>, %arg5: memref<1x4x256xf32, #tpu.memory_space<vmem>>, %arg6: memref<4x256xf32, #tpu.memory_space<vmem>>, %arg7: memref<4x256xf32, #tpu.memory_space<vmem>>, %arg8: memref<4x256xf32, #tpu.memory_space<vmem>>) attributes {dimension_semantics = [#tpu.dimension_semantics<parallel>, #tpu.dimension_semantics<arbitrary>], iteration_bounds = array<i64: 2, 1>, scalar_prefetch = 0 : i64, scratch_operands = 3 : i64, tpu.core_type = #tpu.core_type<tc>, window_params = [{transform_indices = @transform_0, window_bounds = array<i64: 1, 4, 256>}, {pipeline_mode = #tpu.pipeline_mode<synchronous>, transform_indices = @transform_1, window_bounds = array<i64: 12, 4>}, {pipeline_mode = #tpu.pipeline_mode<synchronous>, transform_indices = @transform_2, window_bounds = array<i64: 12, 1>}, {transform_indices = @transform_3, window_bounds = array<i64: 1, 4, 256>}]} {
    %c0_i32 = arith.constant 0 : i32
    %0 = arith.cmpi eq, %arg1, %c0_i32 : i32
    %1 = arith.extui %0 : i1 to i32
    %c0_i32_0 = arith.constant 0 : i32
    %2 = arith.cmpi ne, %1, %c0_i32_0 : i32
    scf.if %2 {
      %c0_11 = arith.constant 0 : index
      %c0_12 = arith.constant 0 : index
      %c0_13 = arith.constant 0 : index
      %24 = vector.load %arg2[%c0_11, %c0_12, %c0_13] : memref<1x4x256xf32, #tpu.memory_space<vmem>>, vector<1x4x256xf32>
      %25 = vector.shape_cast %24 : vector<1x4x256xf32> to vector<4x256xf32>
      %c0_14 = arith.constant 0 : index
      %c0_15 = arith.constant 0 : index
      %26 = vector.load %arg3[%c0_14, %c0_15] : memref<12x4xf32, #tpu.memory_space<vmem>>, vector<12x4xf32>
      %cst_16 = arith.constant dense<0.000000e+00> : vector<12x256xf32>
      %27 = tpu.matmul %26, %25, %cst_16 {dimension_numbers = #tpu.dot_dimension_numbers<[1], [0], [0], [1], [0, 0, 1, 1], [], []>} : vector<12x4xf32>, vector<4x256xf32>, vector<12x256xf32> -> vector<12x256xf32>
      %c0_17 = arith.constant 0 : index
      %c0_18 = arith.constant 0 : index
      %28 = vector.load %arg4[%c0_17, %c0_18] : memref<12x1xf32, #tpu.memory_space<vmem>>, vector<12x1xf32>
      %29 = vector.broadcast %28 : vector<12x1xf32> to vector<12x256xf32>
      %30 = arith.addf %27, %29 : vector<12x256xf32>
      %31 = vector.extract_strided_slice %30 {offsets = [0, 0], sizes = [4, 256], strides = [1, 1]} : vector<12x256xf32> to vector<4x256xf32>
      %c0_19 = arith.constant 0 : index
      %c0_20 = arith.constant 0 : index
      %32 = vector.load %arg6[%c0_19, %c0_20] : memref<4x256xf32, #tpu.memory_space<vmem>>, vector<4x256xf32>
      tpu.vector_store %arg6[%c0_19, %c0_20], %31 {strides = array<i32>} : memref<4x256xf32, #tpu.memory_space<vmem>>, vector<4x256xf32>,
      %33 = vector.extract_strided_slice %30 {offsets = [4, 0], sizes = [4, 256], strides = [1, 1]} : vector<12x256xf32> to vector<4x256xf32>
      %c0_21 = arith.constant 0 : index
      %c0_22 = arith.constant 0 : index
      %34 = vector.load %arg7[%c0_21, %c0_22] : memref<4x256xf32, #tpu.memory_space<vmem>>, vector<4x256xf32>
      tpu.vector_store %arg7[%c0_21, %c0_22], %33 {strides = array<i32>} : memref<4x256xf32, #tpu.memory_space<vmem>>, vector<4x256xf32>,
      %35 = vector.extract_strided_slice %30 {offsets = [8, 0], sizes = [4, 256], strides = [1, 1]} : vector<12x256xf32> to vector<4x256xf32>
      %c0_23 = arith.constant 0 : index
      %c0_24 = arith.constant 0 : index
      %36 = vector.load %arg8[%c0_23, %c0_24] : memref<4x256xf32, #tpu.memory_space<vmem>>, vector<4x256xf32>
      tpu.vector_store %arg8[%c0_23, %c0_24], %35 {strides = array<i32>} : memref<4x256xf32, #tpu.memory_space<vmem>>, vector<4x256xf32>,
    } else {
    }
    %c256_i32 = arith.constant 256 : i32
    %3 = arith.muli %arg1, %c256_i32 : i32
    %4 = tpu.assume_multiple %3, 256 : i32
    %c0 = arith.constant 0 : index
    %5 = arith.index_cast %4 : i32 to index
    %6 = vector.load %arg7[%c0, %5] : memref<4x256xf32, #tpu.memory_space<vmem>>, vector<4x256xf32>
    %c0_1 = arith.constant 0 : index
    %c0_2 = arith.constant 0 : index
    %7 = vector.load %arg6[%c0_1, %c0_2] : memref<4x256xf32, #tpu.memory_space<vmem>>, vector<4x256xf32>
    %cst = arith.constant dense<0.000000e+00> : vector<256x256xf32>
    %8 = tpu.matmul %7, %6, %cst {dimension_numbers = #tpu.dot_dimension_numbers<[0], [0], [1], [1], [0, 1, 1, 1], [], []>} : vector<4x256xf32>, vector<4x256xf32>, vector<256x256xf32> -> vector<256x256xf32>
    %cst_3 = arith.constant dense<0xFF800000> : vector<256xf32>
    %9 = vector.multi_reduction <maximumf>, %8, %cst_3 [0] : vector<256x256xf32> to vector<256xf32>
    %10 = vector.shape_cast %9 : vector<256xf32> to vector<1x256xf32>
    %11 = vector.broadcast %10 : vector<1x256xf32> to vector<256x256xf32>
    %12 = arith.subf %8, %11 : vector<256x256xf32>
    %13 = math.exp %12 : vector<256x256xf32>
    %cst_4 = arith.constant dense<0.000000e+00> : vector<256xf32>
    %14 = vector.multi_reduction <add>, %13, %cst_4 [0] : vector<256x256xf32> to vector<256xf32>
    %15 = vector.shape_cast %14 : vector<256xf32> to vector<1x256xf32>
    %16 = tpu.reciprocal %15 : vector<1x256xf32> -> vector<1x256xf32>
    %17 = vector.broadcast %16 : vector<1x256xf32> to vector<256x256xf32>
    %18 = arith.mulf %13, %17 : vector<256x256xf32>
    %c0_5 = arith.constant 0 : index
    %c0_6 = arith.constant 0 : index
    %19 = vector.load %arg8[%c0_5, %c0_6] : memref<4x256xf32, #tpu.memory_space<vmem>>, vector<4x256xf32>
    %cst_7 = arith.constant dense<0.000000e+00> : vector<4x256xf32>
    %20 = tpu.matmul %19, %18, %cst_7 {dimension_numbers = #tpu.dot_dimension_numbers<[1], [0], [0], [1], [0, 0, 1, 1], [], []>} : vector<4x256xf32>, vector<256x256xf32>, vector<4x256xf32> -> vector<4x256xf32>
    %c0_8 = arith.constant 0 : index
    %c0_9 = arith.constant 0 : index
    %c0_10 = arith.constant 0 : index
    %21 = vector.load %arg5[%c0_8, %c0_9, %c0_10] : memref<1x4x256xf32, #tpu.memory_space<vmem>>, vector<1x4x256xf32>
    %22 = vector.shape_cast %21 : vector<1x4x256xf32> to vector<4x256xf32>
    %23 = vector.shape_cast %20 : vector<4x256xf32> to vector<1x4x256xf32>
    tpu.vector_store %arg5[%c0_8, %c0_9, %c0_10], %23 {strides = array<i32>} : memref<1x4x256xf32, #tpu.memory_space<vmem>>, vector<1x4x256xf32>,
    return
  }
  func.func @transform_0(%arg0: i32, %arg1: i32) -> (i32, i32, i32) {
    %c0_i32 = arith.constant 0 : i32
    %c0_i32_0 = arith.constant 0 : i32
    %c0_i32_1 = arith.constant 0 : i32
    return %arg0, %c0_i32, %c0_i32_0 : i32, i32, i32
  }
  func.func @transform_1(%arg0: i32, %arg1: i32) -> (i32, i32) {
    %c0_i32 = arith.constant 0 : i32
    %c0_i32_0 = arith.constant 0 : i32
    %c0_i32_1 = arith.constant 0 : i32
    return %c0_i32, %c0_i32_0 : i32, i32
  }
  func.func @transform_2(%arg0: i32, %arg1: i32) -> (i32, i32) {
    %c0_i32 = arith.constant 0 : i32
    %c0_i32_0 = arith.constant 0 : i32
    %c0_i32_1 = arith.constant 0 : i32
    return %c0_i32, %c0_i32_0 : i32, i32
  }
  func.func @transform_3(%arg0: i32, %arg1: i32) -> (i32, i32, i32) {
    %c0_i32 = arith.constant 0 : i32
    %c0_i32_0 = arith.constant 0 : i32
    return %arg0, %c0_i32, %arg1 : i32, i32, i32
  }
}

</mosaic_0001>

<llo_original>
// kernel: tpu_custom_call.1
$region0: #{tpu_custom_call.1}
  #allocation0 [shape = 'u32[]', space=smem, size = 0x4, offset = 0x4, fixed_abs, tag = 'smem constant byte address 0x4 - core index']
  #allocation1 [shape = 'u32[144,128]{1,0:T(1,128)}', space=vmem, size = 0x12000, scoped, tag = 'internal scratch']
  #allocation2 [shape = 'f32[4,256]{1,0:T(4,128)}', space=vmem, size = 0x1000, scoped, tag = 'scratch operand']
  #allocation3 [shape = 'f32[4,256]{1,0:T(4,128)}', space=vmem, size = 0x1000, scoped, tag = 'scratch operand']
  #allocation4 [shape = 'f32[4,256]{1,0:T(4,128)}', space=vmem, size = 0x1000, scoped, tag = 'scratch operand']
  %s0 = inlined_call_operand.vmem [shape: f32[2,4,256], index: 0, kind: input, shape index: {}]
  %s1 = inlined_call_operand.vmem [shape: f32[12,4], index: 1, kind: input, shape index: {}]
  %s2 = inlined_call_operand.vmem [shape: f32[12,1], index: 2, kind: input, shape index: {}]
  %s3 = inlined_call_operand.hbm [shape: f32[2,4,256], index: 3, kind: output, shape index: {}]
  %s4 = sld [smem:[#allocation0]]
  $region49: #{tpu_custom_call.1} parent=0
    _
  %s6 = ssub.s32 1, %s4
  %s7 = scalar_select 0, %s6, %s4
  $region1: #{tpu_custom_call.1} parent=0
    #allocation5 [shape = 'u8[8192]{0}', space=vmem, size = 0x2000, scoped, tag = 'output window, operand 0']
    #allocation6 [shape = 's32[2]{0}', space=sflag, size = 0x8, scoped, tag = 'scoped memory for tpu_custom_call.1']
    %8 = vsyncpa [#allocation6], 0
    %s9 = scalar_lea.sflag [#allocation6], 1
    %10 = vsyncpa %s9, 0
    loop: start=0, step=1, limit=4
    $region2: #{tpu_custom_call.1} parent=1 // loop_pre_header
      _
    $region3: #{tpu_custom_call.1} parent=1 // loop_header
      %s12 = sphi 0, %s16
      %p13 = scmp.ge.s32.totalorder %s12, 4
      %s19 = sphi 0, %s31
      %s20 = sphi 0, %s27
      %s21 = sphi 0, %s19
      %s22 = sphi 0, %s20
      %s23 = sphi 0, %s21
      %s24 = sphi 0, %s22
      %s34 = sphi 0, %s36
      %s37 = sphi 0, %s34
      %s38 = sphi 0, %s37
      %s54 = sphi 0, %s38
      %s58 = sphi 0, %s58
      %s60 = sphi 0, %s58
      %s61 = sphi 0, %s60
      %s75 = sphi 0, %s61
      %s79 = sphi 0, %s79
      %s81 = sphi 0, %s79
      %s82 = sphi 0, %s81
      %s96 = sphi 0, %s82
      %s104 = sphi 0, %s106
      %s107 = sphi 0, %s104
      %s108 = sphi 0, %s107
      %s124 = sphi 0, %s108
    $region4: #{tpu_custom_call.1} parent=1 // loop_header_branch
      %15 = sbr.rel (%p13) target = $region8
    $region5: #{tpu_custom_call.1} parent=1 // loop_body
      %s17 = ssub.s32 %s12, 1
      %s18 = ssub.s32 %s12, 2
      %s25 = sadd.s32 1, %s20
      %p26 = scmp.ge.s32.totalorder %s25, 1
      %s27 = scalar_select %p26, 0, %s25
      %s28 = sadd.s32 1, %s19
      %s29 = scalar_select %p26, %s28, %s19
      %p30 = scmp.ge.s32.totalorder %s29, 2
      %s31 = scalar_select %p30, 0, %s29
      %s32 = ssub.s32 %s19, %s31
      %p33 = scmp.eq.s32.totalorder %s32, 0
      %s35 = sadd.s32 %s34, 1
      %s36 = scalar_select %p33, %s34, %s35
      %p39 = pneg %p33
      %p40 = scmp.eq.s32.totalorder %s12, 1
      %p41 = por %p39, %p40
      %p42 = scmp.ne.s32.totalorder %s34, %s37
      %p43 = scmp.eq.s32.totalorder %s12, 0
      %p44 = por %p42, %p43
      %p45 = scmp.ne.s32.totalorder %s34, %s37
      %p46 = scmp.eq.s32.totalorder %s17, 1
      %p47 = por %p45, %p46
      %p48 = scmp.ne.s32.totalorder %s37, %s38
      %p49 = scmp.eq.s32.totalorder %s17, 0
      %p50 = por %p48, %p49
      %p51 = scmp.ne.s32.totalorder %s37, %s38
      %p52 = scmp.eq.s32.totalorder %s18, 1
      %p53 = por %p51, %p52
      %p55 = scmp.ne.s32.totalorder %s38, %s54
      %p56 = scmp.eq.s32.totalorder %s18, 0
      %p57 = por %p55, %p56
      %s59 = sadd.s32 %s58, 1
      %p62 = scmp.eq.s32.totalorder %s12, 1
      %p63 = scmp.ne.s32.totalorder %s58, %s60
      %p64 = scmp.eq.s32.totalorder %s12, 0
      %p65 = por %p63, %p64
      %p66 = scmp.ne.s32.totalorder %s58, %s60
      %p67 = scmp.eq.s32.totalorder %s17, 1
      %p68 = por %p66, %p67
      %p69 = scmp.ne.s32.totalorder %s60, %s61
      %p70 = scmp.eq.s32.totalorder %s17, 0
      %p71 = por %p69, %p70
      %p72 = scmp.ne.s32.totalorder %s60, %s61
      %p73 = scmp.eq.s32.totalorder %s18, 1
      %p74 = por %p72, %p73
      %p76 = scmp.ne.s32.totalorder %s61, %s75
      %p77 = scmp.eq.s32.totalorder %s18, 0
      %p78 = por %p76, %p77
      %s80 = sadd.s32 %s79, 1
      %p83 = scmp.eq.s32.totalorder %s12, 1
      %p84 = scmp.ne.s32.totalorder %s79, %s81
      %p85 = scmp.eq.s32.totalorder %s12, 0
      %p86 = por %p84, %p85
      %p87 = scmp.ne.s32.totalorder %s79, %s81
      %p88 = scmp.eq.s32.totalorder %s17, 1
      %p89 = por %p87, %p88
      %p90 = scmp.ne.s32.totalorder %s81, %s82
      %p91 = scmp.eq.s32.totalorder %s17, 0
      %p92 = por %p90, %p91
      %p93 = scmp.ne.s32.totalorder %s81, %s82
      %p94 = scmp.eq.s32.totalorder %s18, 1
      %p95 = por %p93, %p94
      %p97 = scmp.ne.s32.totalorder %s82, %s96
      %p98 = scmp.eq.s32.totalorder %s18, 0
      %p99 = por %p97, %p98
      %s100 = ssub.s32 %s19, %s31
      %s101 = ssub.s32 %s20, %s27
      %s102 = sor.u32 %s100, %s101
      %p103 = scmp.eq.s32.totalorder %s102, 0
      %s105 = sadd.s32 %s104, 1
      %s106 = scalar_select %p103, %s104, %s105
      %p109 = pneg %p103
      %p110 = scmp.eq.s32.totalorder %s12, 1
      %p111 = por %p109, %p110
      %p112 = scmp.ne.s32.totalorder %s104, %s107
      %p113 = scmp.eq.s32.totalorder %s12, 0
      %p114 = por %p112, %p113
      %p115 = scmp.ne.s32.totalorder %s104, %s107
      %p116 = scmp.eq.s32.totalorder %s17, 1
      %p117 = por %p115, %p116
      %p118 = scmp.ne.s32.totalorder %s107, %s108
      %p119 = scmp.eq.s32.totalorder %s17, 0
      %p120 = por %p118, %p119
      %p121 = scmp.ne.s32.totalorder %s107, %s108
      %p122 = scmp.eq.s32.totalorder %s18, 1
      %p123 = por %p121, %p122
      %p125 = scmp.ne.s32.totalorder %s108, %s124
      %p126 = scmp.eq.s32.totalorder %s18, 0
      %p127 = por %p125, %p126
      %p128 = scmp.le.s32.totalorder 1, %s12
      %p129 = scmp.lt.s32.totalorder %s12, 3
      %p130 = pnand %p128, %p129
      %p131 = pneg %p130
      // Predicated region
      $region9: #{tpu_custom_call.1} parent=5 // pred_check
        _
      $region10: #{tpu_custom_call.1} parent=5 // pred_check_branch
        %133 = sbr.rel (%p130) target = $region12
      $region11: #{tpu_custom_call.1} parent=5 // pred_region
        %s134 = ssub.s32 %s12, 1
        // Predicated region
        $region13: #{tpu_custom_call.1} parent=11 // pred_check
          %p135 = pneg %p71
        $region14: #{tpu_custom_call.1} parent=11 // pred_check_branch
          %137 = sbr.rel (%p135) target = $region16
        $region15: #{tpu_custom_call.1} parent=11 // pred_region
          _
        $region16: #{tpu_custom_call.1} parent=11 // pred_fallthru
          _
        // Predicated region
        $region17: #{tpu_custom_call.1} parent=11 // pred_check
          %p138 = pneg %p92
        $region18: #{tpu_custom_call.1} parent=11 // pred_check_branch
          %140 = sbr.rel (%p138) target = $region20
        $region19: #{tpu_custom_call.1} parent=11 // pred_region
          _
        $region20: #{tpu_custom_call.1} parent=11 // pred_fallthru
          _
      $region12: #{tpu_custom_call.1} parent=5 // pred_fallthru
        _
      %p141 = scmp.lt.s32.totalorder %s12, 2
      // Predicated region
      $region21: #{tpu_custom_call.1} parent=5 // pred_check
        %p142 = pneg %p141
      $region22: #{tpu_custom_call.1} parent=5 // pred_check_branch
        %144 = sbr.rel (%p142) target = $region24
      $region23: #{tpu_custom_call.1} parent=5 // pred_region
        // Predicated region
        $region25: #{tpu_custom_call.1} parent=23 // pred_check
          %p145 = pneg %p44
        $region26: #{tpu_custom_call.1} parent=23 // pred_check_branch
          %147 = sbr.rel (%p145) target = $region28
        $region27: #{tpu_custom_call.1} parent=23 // pred_region
          %p148 = scmp.lt.s32.totalorder %s19, 1
          %s149 = scalar_select %p148, %s19, 1
          %s150 = smul.addr %s149, 2
          %s151 = smul.addr %s150, 4
          %s152 = scalar_lea.vmem %s0, %s151
        $region28: #{tpu_custom_call.1} parent=23 // pred_fallthru
          _
      $region24: #{tpu_custom_call.1} parent=5 // pred_fallthru
        _
      %p153 = scmp.le.s32.totalorder 1, %s12
      %p154 = scmp.lt.s32.totalorder %s12, 3
      %p155 = pnand %p153, %p154
      %p156 = pneg %p155
      // Predicated region
      $region29: #{tpu_custom_call.1} parent=5 // pred_check
        _
      $region30: #{tpu_custom_call.1} parent=5 // pred_check_branch
        %158 = sbr.rel (%p155) target = $region32
      $region31: #{tpu_custom_call.1} parent=5 // pred_region
        %s159 = ssub.s32 %s12, 1
        %p160 = scmp.lt.s32.totalorder %s21, 1
        %s161 = scalar_select %p160, %s21, 1
        %s162 = smul.addr %s161, 2
        %s163 = smul.addr %s162, 4
        %s164 = scalar_lea.vmem %s0, %s163
        %p165 = pneg %p50
        %p166 = pneg %p47
        %p167 = pneg %p71
        %p168 = pneg %p68
        %p169 = pneg %p92
        %p170 = pneg %p89
        %p171 = pneg %p120
        %p172 = pneg %p117
        %s173 = sand.u32 %s107, 1
        %s174 = scalar_lea.sflag [#allocation6], %s173
        %s175 = sand.u32 %s107, 1
        %s176 = smul.addr %s175, 8
        %s177 = scalar_lea.vmem [#allocation5], %s176
        %p178 = scmp.lt.s32.totalorder %s21, 1
        %s179 = scalar_select %p178, %s21, 1
        %s180 = smul.addr %s179, 2
        %s181 = smul.addr %s180, 4
        %s182 = scalar_lea.vmem %s0, %s181
        %s183 = smul.u32 2, %s22
        %p184 = scmp.eq.s32.totalorder %s22, 0
        // Predicated region
        $region33: #{tpu_custom_call.1} parent=31 // pred_check
          %p185 = pneg %p184
        $region34: #{tpu_custom_call.1} parent=31 // pred_check_branch
          %187 = sbr.rel (%p185) target = $region36
        $region35: #{tpu_custom_call.1} parent=31 // pred_region
          %v188 = vld [vmem:[%s182] sm:$0xff]
          %v189 = vld [vmem:[%s1] sm:$0xff]
          %v190 = vld [vmem:[%s1 + $0x8] sm:$0xf]
          %v191 = vld [vmem:[%s2] sm:$0xff]
          %v192 = vld [vmem:[%s2 + $0x8] sm:$0xf]
          %194 = vset.pattern.permute.xlu0 0
          %195 = vperm.xlu0 %194, %v191
          %v196 = vpop.permute.xlu0 %195
          %199 = vset.pattern.permute.xlu0 0
          %200 = vperm.xlu0 %199, %v192
          %v201 = vpop.permute.xlu0 %200
          %v204 = vcombine.high %v188, %v188
          %vm205 = vcmask 31744
          %v207 = vsel %vm205, %v189, 0
          %v210 = vsel %vm205, %v190, 0
          %vm212 = vcmask 1043456
          %v213 = vsel %vm212, %v188, 0
          %v215 = vsel %vm212, %v204, 0
          %217 = vmatprep.subr.mxu0 %v215
          %218 = vmatpush1.msra.mxu0 %v213
          %219 = vmatprep.subr.mxu0 0.0
          %220 = vmatpush1.msra.mxu0 0.0
          %221 = vmatprep.subr.mxu0 0.0
          %222 = vmatpush1.msra.mxu0 0.0
          %223 = vmatprep.subr.mxu0 0.0
          %224 = vmatpush1.msra.mxu0 0.0
          %225 = vmatprep.subr.mxu0 0.0
          %226 = vmatpush1.msra.mxu0 0.0
          %227 = vmatprep.subr.mxu0 0.0
          %228 = vmatpush1.msra.mxu0 0.0
          %229 = vmatprep.subr.mxu0 0.0
          %230 = vmatpush1.msra.mxu0 0.0
          %231 = vmatprep.subr.mxu0 0.0
          %232 = vmatpush1.msra.mxu0 0.0
          %233 = vmatprep.subr.mxu0 0.0
          %234 = vmatpush1.msra.mxu0 0.0
          %235 = vmatprep.subr.mxu0 0.0
          %236 = vmatpush1.msra.mxu0 0.0
          %237 = vmatprep.subr.mxu0 0.0
          %238 = vmatpush1.msra.mxu0 0.0
          %239 = vmatprep.subr.mxu0 0.0
          %240 = vmatpush1.msra.mxu0 0.0
          %241 = vmatprep.subr.mxu0 0.0
          %242 = vmatpush1.msra.mxu0 0.0
          %243 = vmatprep.subr.mxu0 0.0
          %244 = vmatpush1.msra.mxu0 0.0
          %245 = vmatprep.subr.mxu0 0.0
          %246 = vmatpush1.msra.mxu0 0.0
          %247 = vmatprep.subr.mxu0 0.0
          %248 = vmatpush1.msra.mxu0 0.0
          %249 = vmatprep.subr.mxu0 0.0
          %250 = vmatpush1.msra.mxu0 0.0
          %251 = vmatprep.subr.mxu0 0.0
          %252 = vmatpush1.msra.mxu0 0.0
          %253 = vmatprep.subr.mxu0 0.0
          %254 = vmatpush1.msra.mxu0 0.0
          %255 = vmatprep.subr.mxu0 0.0
          %256 = vmatpush1.msra.mxu0 0.0
          %257 = vmatprep.subr.mxu0 0.0
          %258 = vmatpush1.msra.mxu0 0.0
          %259 = vmatprep.subr.mxu0 0.0
          %260 = vmatpush1.msra.mxu0 0.0
          %261 = vmatprep.subr.mxu0 0.0
          %262 = vmatpush1.msra.mxu0 0.0
          %263 = vmatprep.subr.mxu0 0.0
          %264 = vmatpush1.msra.mxu0 0.0
          %265 = vmatprep.subr.mxu0 0.0
          %266 = vmatpush1.msra.mxu0 0.0
          %267 = vmatprep.subr.mxu0 0.0
          %268 = vmatpush1.msra.mxu0 0.0
          %269 = vmatprep.subr.mxu0 0.0
          %270 = vmatpush1.msra.mxu0 0.0
          %271 = vmatprep.subr.mxu0 0.0
          %272 = vmatpush1.msra.mxu0 0.0
          %273 = vmatprep.subr.mxu0 0.0
          %274 = vmatpush1.msra.mxu0 0.0
          %275 = vmatprep.subr.mxu0 0.0
          %276 = vmatpush1.msra.mxu0 0.0
          %277 = vmatprep.subr.mxu0 0.0
          %278 = vmatpush1.msra.mxu0 0.0
          %279 = vmatprep.subr.mxu0 0.0
          %280 = vmatpush1.msra.mxu0 0.0
          %281 = vmatprep.mubr.f32.mxu0 0.0
          %282 = vmatmul.mubr.f32.gmra.mrb[0].mxu0 %v207
          %v283 = vpop.f32.mrb[0].mxu0
          %v284 = vadd.f32 %v196, %v283
          %v285 = vpop.f32.mrb[0].mxu0
          %v286 = vadd.f32 %v196, %v285
          %287 = vmatprep.mubr.f32.mxu0 0.0
          %288 = vmatmul.mubr.f32.gmra.mrb[0].mxu0 %v210
          %v289 = vpop.f32.mrb[0].mxu0
          %v290 = vadd.f32 %v201, %v289
          %v291 = vpop.f32.mrb[0].mxu0
          %v292 = vadd.f32 %v201, %v291
          %293 = vdwg.mxu0
          %v296 = vcombine.low %v284, %v286
          %298 = vst [vmem:[#allocation2] sm:$0xff] %v296
          %v299 = vcombine.high %v284, %v286
          %301 = vst [vmem:[#allocation3] sm:$0xff] %v299
          %v304 = vcombine.low %v290, %v292
          %306 = vst [vmem:[#allocation4] sm:$0xff] %v304
        $region36: #{tpu_custom_call.1} parent=31 // pred_fallthru
          _
        %s307 = smul.u32 %s22, 256
        %s308 = sshra.s32 %s307, 7
        %s309 = sand.u32 %s307, 127
        %s310 = smul.addr %s308, 4
        %s311 = scalar_lea.vmem [#allocation3], %s310
        %v312 = vld [vmem:[%s311] sm:$0xff]
        %v313 = vld [vmem:[#allocation2] sm:$0xff]
        %v315 = vcombine.high %v313, %v313
        %317 = vxpose.xlu0.b32.start [1/16] %v313, 128
        %318 = vxpose.xlu0.b32.cont [2/16] 0.0, 128
        %319 = vxpose.xlu0.b32.cont [3/16] 0.0, 128
        %320 = vxpose.xlu0.b32.cont [4/16] 0.0, 128
        %321 = vxpose.xlu0.b32.cont [5/16] 0.0, 128
        %322 = vxpose.xlu0.b32.cont [6/16] 0.0, 128
        %323 = vxpose.xlu0.b32.cont [7/16] 0.0, 128
        %324 = vxpose.xlu0.b32.cont [8/16] 0.0, 128
        %325 = vxpose.xlu0.b32.cont [9/16] 0.0, 128
        %326 = vxpose.xlu0.b32.cont [10/16] 0.0, 128
        %327 = vxpose.xlu0.b32.cont [11/16] 0.0, 128
        %328 = vxpose.xlu0.b32.cont [12/16] 0.0, 128
        %329 = vxpose.xlu0.b32.cont [13/16] 0.0, 128
        %330 = vxpose.xlu0.b32.cont [14/16] 0.0, 128
        %331 = vxpose.xlu0.b32.cont [15/16] 0.0, 128
        %332 = vxpose.xlu0.b32.end [16/16] 0.0, 128
        %v333 = vpop.trf.xlu0
        %v334 = vpop.trf.xlu0
        %v335 = vpop.trf.xlu0
        %v336 = vpop.trf.xlu0
        %v337 = vpop.trf.xlu0
        %v338 = vpop.trf.xlu0
        %v339 = vpop.trf.xlu0
        %v340 = vpop.trf.xlu0
        %v341 = vpop.trf.xlu0
        %v342 = vpop.trf.xlu0
        %v343 = vpop.trf.xlu0
        %v344 = vpop.trf.xlu0
        %v345 = vpop.trf.xlu0
        %v346 = vpop.trf.xlu0
        %v347 = vpop.trf.xlu0
        %v348 = vpop.trf.xlu0
        %349 = vxpose.xlu0.b32.start [1/16] %v315, 128
        %350 = vxpose.xlu0.b32.cont [2/16] 0.0, 128
        %351 = vxpose.xlu0.b32.cont [3/16] 0.0, 128
        %352 = vxpose.xlu0.b32.cont [4/16] 0.0, 128
        %353 = vxpose.xlu0.b32.cont [5/16] 0.0, 128
        %354 = vxpose.xlu0.b32.cont [6/16] 0.0, 128
        %355 = vxpose.xlu0.b32.cont [7/16] 0.0, 128
        %356 = vxpose.xlu0.b32.cont [8/16] 0.0, 128
        %357 = vxpose.xlu0.b32.cont [9/16] 0.0, 128
        %358 = vxpose.xlu0.b32.cont [10/16] 0.0, 128
        %359 = vxpose.xlu0.b32.cont [11/16] 0.0, 128
        %360 = vxpose.xlu0.b32.cont [12/16] 0.0, 128
        %361 = vxpose.xlu0.b32.cont [13/16] 0.0, 128
        %362 = vxpose.xlu0.b32.cont [14/16] 0.0, 128
        %363 = vxpose.xlu0.b32.cont [15/16] 0.0, 128
        %364 = vxpose.xlu0.b32.end [16/16] 0.0, 128
        %v365 = vpop.trf.xlu0
        %v366 = vpop.trf.xlu0
        %v367 = vpop.trf.xlu0
        %v368 = vpop.trf.xlu0
        %v369 = vpop.trf.xlu0
        %v370 = vpop.trf.xlu0
        %v371 = vpop.trf.xlu0
        %v372 = vpop.trf.xlu0
        %v373 = vpop.trf.xlu0
        %v374 = vpop.trf.xlu0
        %v375 = vpop.trf.xlu0
        %v376 = vpop.trf.xlu0
        %v377 = vpop.trf.xlu0
        %v378 = vpop.trf.xlu0
        %v379 = vpop.trf.xlu0
        %v380 = vpop.trf.xlu0
        %v382 = vcombine.high %v312, %v312
        %vm383 = vcmask 31744
        %v385 = vsel %vm383, %v333, 0
        %v388 = vsel %vm383, %v334, 0
        %v391 = vsel %vm383, %v335, 0
        %v394 = vsel %vm383, %v336, 0
        %v397 = vsel %vm383, %v337, 0
        %v400 = vsel %vm383, %v338, 0
        %v403 = vsel %vm383, %v339, 0
        %v406 = vsel %vm383, %v340, 0
        %v409 = vsel %vm383, %v341, 0
        %v412 = vsel %vm383, %v342, 0
        %v415 = vsel %vm383, %v343, 0
        %v418 = vsel %vm383, %v344, 0
        %v421 = vsel %vm383, %v345, 0
        %v424 = vsel %vm383, %v346, 0
        %v427 = vsel %vm383, %v347, 0
        %v430 = vsel %vm383, %v348, 0
        %v433 = vsel %vm383, %v365, 0
        %v436 = vsel %vm383, %v366, 0
        %v439 = vsel %vm383, %v367, 0
        %v442 = vsel %vm383, %v368, 0
        %v445 = vsel %vm383, %v369, 0
        %v448 = vsel %vm383, %v370, 0
        %v451 = vsel %vm383, %v371, 0
        %v454 = vsel %vm383, %v372, 0
        %v457 = vsel %vm383, %v373, 0
        %v460 = vsel %vm383, %v374, 0
        %v463 = vsel %vm383, %v375, 0
        %v466 = vsel %vm383, %v376, 0
        %v469 = vsel %vm383, %v377, 0
        %v472 = vsel %vm383, %v378, 0
        %v475 = vsel %vm383, %v379, 0
        %v478 = vsel %vm383, %v380, 0
        %vm480 = vcmask 1043456
        %v481 = vsel %vm480, %v312, 0
        %v483 = vsel %vm480, %v382, 0
        %485 = vmatprep.subr.mxu0 %v483
        %486 = vmatpush1.msra.mxu0 %v481
        %487 = vmatprep.subr.mxu0 0.0
        %488 = vmatpush1.msra.mxu0 0.0
        %489 = vmatprep.subr.mxu0 0.0
        %490 = vmatpush1.msra.mxu0 0.0
        %491 = vmatprep.subr.mxu0 0.0
        %492 = vmatpush1.msra.mxu0 0.0
        %493 = vmatprep.subr.mxu0 0.0
        %494 = vmatpush1.msra.mxu0 0.0
        %495 = vmatprep.subr.mxu0 0.0
        %496 = vmatpush1.msra.mxu0 0.0
        %497 = vmatprep.subr.mxu0 0.0
        %498 = vmatpush1.msra.mxu0 0.0
        %499 = vmatprep.subr.mxu0 0.0
        %500 = vmatpush1.msra.mxu0 0.0
        %501 = vmatprep.subr.mxu0 0.0
        %502 = vmatpush1.msra.mxu0 0.0
        %503 = vmatprep.subr.mxu0 0.0
        %504 = vmatpush1.msra.mxu0 0.0
        %505 = vmatprep.subr.mxu0 0.0
        %506 = vmatpush1.msra.mxu0 0.0
        %507 = vmatprep.subr.mxu0 0.0
        %508 = vmatpush1.msra.mxu0 0.0
        %509 = vmatprep.subr.mxu0 0.0
        %510 = vmatpush1.msra.mxu0 0.0
        %511 = vmatprep.subr.mxu0 0.0
        %512 = vmatpush1.msra.mxu0 0.0
        %513 = vmatprep.subr.mxu0 0.0
        %514 = vmatpush1.msra.mxu0 0.0
        %515 = vmatprep.subr.mxu0 0.0
        %516 = vmatpush1.msra.mxu0 0.0
        %517 = vmatprep.subr.mxu0 0.0
        %518 = vmatpush1.msra.mxu0 0.0
        %519 = vmatprep.subr.mxu0 0.0
        %520 = vmatpush1.msra.mxu0 0.0
        %521 = vmatprep.subr.mxu0 0.0
        %522 = vmatpush1.msra.mxu0 0.0
        %523 = vmatprep.subr.mxu0 0.0
        %524 = vmatpush1.msra.mxu0 0.0
        %525 = vmatprep.subr.mxu0 0.0
        %526 = vmatpush1.msra.mxu0 0.0
        %527 = vmatprep.subr.mxu0 0.0
        %528 = vmatpush1.msra.mxu0 0.0
        %529 = vmatprep.subr.mxu0 0.0
        %530 = vmatpush1.msra.mxu0 0.0
        %531 = vmatprep.subr.mxu0 0.0
        %532 = vmatpush1.msra.mxu0 0.0
        %533 = vmatprep.subr.mxu0 0.0
        %534 = vmatpush1.msra.mxu0 0.0
        %535 = vmatprep.subr.mxu0 0.0
        %536 = vmatpush1.msra.mxu0 0.0
        %537 = vmatprep.subr.mxu0 0.0
        %538 = vmatpush1.msra.mxu0 0.0
        %539 = vmatprep.subr.mxu0 0.0
        %540 = vmatpush1.msra.mxu0 0.0
        %541 = vmatprep.subr.mxu0 0.0
        %542 = vmatpush1.msra.mxu0 0.0
        %543 = vmatprep.subr.mxu0 0.0
        %544 = vmatpush1.msra.mxu0 0.0
        %545 = vmatprep.subr.mxu0 0.0
        %546 = vmatpush1.msra.mxu0 0.0
        %547 = vmatprep.subr.mxu0 0.0
        %548 = vmatpush1.msra.mxu0 0.0
        %549 = vmatprep.mubr.f32.mxu0 0.0
        %550 = vmatmul.mubr.f32.gmra.mrb[0].mxu0 %v385
        %v551 = vpop.f32.mrb[0].mxu0
        %v552 = vadd.f32 0.0, %v551
        %v553 = vpop.f32.mrb[0].mxu0
        %v554 = vadd.f32 0.0, %v553
        %555 = vmatprep.mubr.f32.mxu0 0.0
        %556 = vmatmul.mubr.f32.gmra.mrb[0].mxu0 %v388
        %v557 = vpop.f32.mrb[0].mxu0
        %v558 = vadd.f32 0.0, %v557
        %v559 = vpop.f32.mrb[0].mxu0
        %v560 = vadd.f32 0.0, %v559
        %561 = vmatprep.mubr.f32.mxu0 0.0
        %562 = vmatmul.mubr.f32.gmra.mrb[0].mxu0 %v391
        %v563 = vpop.f32.mrb[0].mxu0
        %v564 = vadd.f32 0.0, %v563
        %v565 = vpop.f32.mrb[0].mxu0
        %v566 = vadd.f32 0.0, %v565
        %567 = vmatprep.mubr.f32.mxu0 0.0
        %568 = vmatmul.mubr.f32.gmra.mrb[0].mxu0 %v394
        %v569 = vpop.f32.mrb[0].mxu0
        %v570 = vadd.f32 0.0, %v569
        %v571 = vpop.f32.mrb[0].mxu0
        %v572 = vadd.f32 0.0, %v571
        %573 = vmatprep.mubr.f32.mxu0 0.0
        %574 = vmatmul.mubr.f32.gmra.mrb[0].mxu0 %v397
        %v575 = vpop.f32.mrb[0].mxu0
        %v576 = vadd.f32 0.0, %v575
        %v577 = vpop.f32.mrb[0].mxu0
        %v578 = vadd.f32 0.0, %v577
        %579 = vmatprep.mubr.f32.mxu0 0.0
        %580 = vmatmul.mubr.f32.gmra.mrb[0].mxu0 %v400
        %v581 = vpop.f32.mrb[0].mxu0
        %v582 = vadd.f32 0.0, %v581
        %v583 = vpop.f32.mrb[0].mxu0
        %v584 = vadd.f32 0.0, %v583
        %585 = vmatprep.mubr.f32.mxu0 0.0
        %586 = vmatmul.mubr.f32.gmra.mrb[0].mxu0 %v403
        %v587 = vpop.f32.mrb[0].mxu0
        %v588 = vadd.f32 0.0, %v587
        %v589 = vpop.f32.mrb[0].mxu0
        %v590 = vadd.f32 0.0, %v589
        %591 = vmatprep.mubr.f32.mxu0 0.0
        %592 = vmatmul.mubr.f32.gmra.mrb[0].mxu0 %v406
        %v593 = vpop.f32.mrb[0].mxu0
        %v594 = vadd.f32 0.0, %v593
        %v595 = vpop.f32.mrb[0].mxu0
        %v596 = vadd.f32 0.0, %v595
        %597 = vmatprep.mubr.f32.mxu0 0.0
        %598 = vmatmul.mubr.f32.gmra.mrb[0].mxu0 %v409
        %v599 = vpop.f32.mrb[0].mxu0
        %v600 = vadd.f32 0.0, %v599
        %v601 = vpop.f32.mrb[0].mxu0
        %v602 = vadd.f32 0.0, %v601
        %603 = vmatprep.mubr.f32.mxu0 0.0
        %604 = vmatmul.mubr.f32.gmra.mrb[0].mxu0 %v412
        %v605 = vpop.f32.mrb[0].mxu0
        %v606 = vadd.f32 0.0, %v605
        %v607 = vpop.f32.mrb[0].mxu0
        %v608 = vadd.f32 0.0, %v607
        %609 = vmatprep.mubr.f32.mxu0 0.0
        %610 = vmatmul.mubr.f32.gmra.mrb[0].mxu0 %v415
        %v611 = vpop.f32.mrb[0].mxu0
        %v612 = vadd.f32 0.0, %v611
        %v613 = vpop.f32.mrb[0].mxu0
        %v614 = vadd.f32 0.0, %v613
        %615 = vmatprep.mubr.f32.mxu0 0.0
        %616 = vmatmul.mubr.f32.gmra.mrb[0].mxu0 %v418
        %v617 = vpop.f32.mrb[0].mxu0
        %v618 = vadd.f32 0.0, %v617
        %v619 = vpop.f32.mrb[0].mxu0
        %v620 = vadd.f32 0.0, %v619
        %621 = vmatprep.mubr.f32.mxu0 0.0
        %622 = vmatmul.mubr.f32.gmra.mrb[0].mxu0 %v421
        %v623 = vpop.f32.mrb[0].mxu0
        %v624 = vadd.f32 0.0, %v623
        %v625 = vpop.f32.mrb[0].mxu0
        %v626 = vadd.f32 0.0, %v625
        %627 = vmatprep.mubr.f32.mxu0 0.0
        %628 = vmatmul.mubr.f32.gmra.mrb[0].mxu0 %v424
        %v629 = vpop.f32.mrb[0].mxu0
        %v630 = vadd.f32 0.0, %v629
        %v631 = vpop.f32.mrb[0].mxu0
        %v632 = vadd.f32 0.0, %v631
        %633 = vmatprep.mubr.f32.mxu0 0.0
        %634 = vmatmul.mubr.f32.gmra.mrb[0].mxu0 %v427
        %v635 = vpop.f32.mrb[0].mxu0
        %v636 = vadd.f32 0.0, %v635
        %v637 = vpop.f32.mrb[0].mxu0
        %v638 = vadd.f32 0.0, %v637
        %639 = vmatprep.mubr.f32.mxu0 0.0
        %640 = vmatmul.mubr.f32.gmra.mrb[0].mxu0 %v430
        %v641 = vpop.f32.mrb[0].mxu0
        %v642 = vadd.f32 0.0, %v641
        %v643 = vpop.f32.mrb[0].mxu0
        %v644 = vadd.f32 0.0, %v643
        %645 = vmatprep.mubr.f32.mxu0 0.0
        %646 = vmatmul.mubr.f32.gmra.mrb[0].mxu0 %v433
        %v647 = vpop.f32.mrb[0].mxu0
        %v648 = vadd.f32 0.0, %v647
        %v649 = vpop.f32.mrb[0].mxu0
        %v650 = vadd.f32 0.0, %v649
        %651 = vmatprep.mubr.f32.mxu0 0.0
        %652 = vmatmul.mubr.f32.gmra.mrb[0].mxu0 %v436
        %v653 = vpop.f32.mrb[0].mxu0
        %v654 = vadd.f32 0.0, %v653
        %v655 = vpop.f32.mrb[0].mxu0
        %v656 = vadd.f32 0.0, %v655
        %657 = vmatprep.mubr.f32.mxu0 0.0
        %658 = vmatmul.mubr.f32.gmra.mrb[0].mxu0 %v439
        %v659 = vpop.f32.mrb[0].mxu0
        %v660 = vadd.f32 0.0, %v659
        %v661 = vpop.f32.mrb[0].mxu0
        %v662 = vadd.f32 0.0, %v661
        %663 = vmatprep.mubr.f32.mxu0 0.0
        %664 = vmatmul.mubr.f32.gmra.mrb[0].mxu0 %v442
        %v665 = vpop.f32.mrb[0].mxu0
        %v666 = vadd.f32 0.0, %v665
        %v667 = vpop.f32.mrb[0].mxu0
        %v668 = vadd.f32 0.0, %v667
        %669 = vmatprep.mubr.f32.mxu0 0.0
        %670 = vmatmul.mubr.f32.gmra.mrb[0].mxu0 %v445
        %v671 = vpop.f32.mrb[0].mxu0
        %v672 = vadd.f32 0.0, %v671
        %v673 = vpop.f32.mrb[0].mxu0
        %v674 = vadd.f32 0.0, %v673
        %675 = vmatprep.mubr.f32.mxu0 0.0
        %676 = vmatmul.mubr.f32.gmra.mrb[0].mxu0 %v448
        %v677 = vpop.f32.mrb[0].mxu0
        %v678 = vadd.f32 0.0, %v677
        %v679 = vpop.f32.mrb[0].mxu0
        %v680 = vadd.f32 0.0, %v679
        %681 = vmatprep.mubr.f32.mxu0 0.0
        %682 = vmatmul.mubr.f32.gmra.mrb[0].mxu0 %v451
        %v683 = vpop.f32.mrb[0].mxu0
        %v684 = vadd.f32 0.0, %v683
        %v685 = vpop.f32.mrb[0].mxu0
        %v686 = vadd.f32 0.0, %v685
        %687 = vmatprep.mubr.f32.mxu0 0.0
        %688 = vmatmul.mubr.f32.gmra.mrb[0].mxu0 %v454
        %v689 = vpop.f32.mrb[0].mxu0
        %v690 = vadd.f32 0.0, %v689
        %v691 = vpop.f32.mrb[0].mxu0
        %v692 = vadd.f32 0.0, %v691
        %693 = vmatprep.mubr.f32.mxu0 0.0
        %694 = vmatmul.mubr.f32.gmra.mrb[0].mxu0 %v457
        %v695 = vpop.f32.mrb[0].mxu0
        %v696 = vadd.f32 0.0, %v695
        %v697 = vpop.f32.mrb[0].mxu0
        %v698 = vadd.f32 0.0, %v697
        %699 = vmatprep.mubr.f32.mxu0 0.0
        %700 = vmatmul.mubr.f32.gmra.mrb[0].mxu0 %v460
        %v701 = vpop.f32.mrb[0].mxu0
        %v702 = vadd.f32 0.0, %v701
        %v703 = vpop.f32.mrb[0].mxu0
        %v704 = vadd.f32 0.0, %v703
        %705 = vmatprep.mubr.f32.mxu0 0.0
        %706 = vmatmul.mubr.f32.gmra.mrb[0].mxu0 %v463
        %v707 = vpop.f32.mrb[0].mxu0
        %v708 = vadd.f32 0.0, %v707
        %v709 = vpop.f32.mrb[0].mxu0
        %v710 = vadd.f32 0.0, %v709
        %711 = vmatprep.mubr.f32.mxu0 0.0
        %712 = vmatmul.mubr.f32.gmra.mrb[0].mxu0 %v466
        %v713 = vpop.f32.mrb[0].mxu0
        %v714 = vadd.f32 0.0, %v713
        %v715 = vpop.f32.mrb[0].mxu0
        %v716 = vadd.f32 0.0, %v715
        %717 = vmatprep.mubr.f32.mxu0 0.0
        %718 = vmatmul.mubr.f32.gmra.mrb[0].mxu0 %v469
        %v719 = vpop.f32.mrb[0].mxu0
        %v720 = vadd.f32 0.0, %v719
        %v721 = vpop.f32.mrb[0].mxu0
        %v722 = vadd.f32 0.0, %v721
        %723 = vmatprep.mubr.f32.mxu0 0.0
        %724 = vmatmul.mubr.f32.gmra.mrb[0].mxu0 %v472
        %v725 = vpop.f32.mrb[0].mxu0
        %v726 = vadd.f32 0.0, %v725
        %v727 = vpop.f32.mrb[0].mxu0
        %v728 = vadd.f32 0.0, %v727
        %729 = vmatprep.mubr.f32.mxu0 0.0
        %730 = vmatmul.mubr.f32.gmra.mrb[0].mxu0 %v475
        %v731 = vpop.f32.mrb[0].mxu0
        %v732 = vadd.f32 0.0, %v731
        %v733 = vpop.f32.mrb[0].mxu0
        %v734 = vadd.f32 0.0, %v733
        %735 = vmatprep.mubr.f32.mxu0 0.0
        %736 = vmatmul.mubr.f32.gmra.mrb[0].mxu0 %v478
        %v737 = vpop.f32.mrb[0].mxu0
        %v738 = vadd.f32 0.0, %v737
        %v739 = vpop.f32.mrb[0].mxu0
        %v740 = vadd.f32 0.0, %v739
        %741 = vdwg.mxu0
        %v742 = vmax.f32 %v552, %v564
        %v743 = vmax.f32 %v558, %v570
        %v744 = vmax.f32 %v742, %v576
        %v745 = vmax.f32 %v743, %v582
        %v746 = vmax.f32 %v744, %v588
        %v747 = vmax.f32 %v745, %v594
        %v748 = vmax.f32 %v746, %v600
        %v749 = vmax.f32 %v747, %v606
        %v750 = vmax.f32 %v748, %v612
        %v751 = vmax.f32 %v749, %v618
        %v752 = vmax.f32 %v750, %v624
        %v753 = vmax.f32 %v751, %v630
        %v754 = vmax.f32 %v752, %v636
        %v755 = vmax.f32 %v753, %v642
        %v756 = vmax.f32 %v754, %v648
        %v757 = vmax.f32 %v755, %v654
        %v758 = vmax.f32 %v756, %v660
        %v759 = vmax.f32 %v757, %v666
        %v760 = vmax.f32 %v758, %v672
        %v761 = vmax.f32 %v759, %v678
        %v762 = vmax.f32 %v760, %v684
        %v763 = vmax.f32 %v761, %v690
        %v764 = vmax.f32 %v762, %v696
        %v765 = vmax.f32 %v763, %v702
        %v766 = vmax.f32 %v764, %v708
        %v767 = vmax.f32 %v765, %v714
        %v768 = vmax.f32 %v766, %v720
        %v769 = vmax.f32 %v767, %v726
        %v770 = vmax.f32 %v768, %v732
        %v771 = vmax.f32 %v769, %v738
        %v772 = vmax.f32 %v770, %v771
        %v773 = vrot.slane %v772, 4
        %v774 = vmax.f32 %v772, %v773
        %v775 = vrot.slane %v774, 2
        %v776 = vmax.f32 %v774, %v775
        %v777 = vrot.slane %v776, 1
        %v778 = vmax.f32 %v776, %v777
        %v779 = vmax.f32 %v554, %v566
        %v780 = vmax.f32 %v560, %v572
        %v781 = vmax.f32 %v779, %v578
        %v782 = vmax.f32 %v780, %v584
        %v783 = vmax.f32 %v781, %v590
        %v784 = vmax.f32 %v782, %v596
        %v785 = vmax.f32 %v783, %v602
        %v786 = vmax.f32 %v784, %v608
        %v787 = vmax.f32 %v785, %v614
        %v788 = vmax.f32 %v786, %v620
        %v789 = vmax.f32 %v787, %v626
        %v790 = vmax.f32 %v788, %v632
        %v791 = vmax.f32 %v789, %v638
        %v792 = vmax.f32 %v790, %v644
        %v793 = vmax.f32 %v791, %v650
        %v794 = vmax.f32 %v792, %v656
        %v795 = vmax.f32 %v793, %v662
        %v796 = vmax.f32 %v794, %v668
        %v797 = vmax.f32 %v795, %v674
        %v798 = vmax.f32 %v796, %v680
        %v799 = vmax.f32 %v797, %v686
        %v800 = vmax.f32 %v798, %v692
        %v801 = vmax.f32 %v799, %v698
        %v802 = vmax.f32 %v800, %v704
        %v803 = vmax.f32 %v801, %v710
        %v804 = vmax.f32 %v802, %v716
        %v805 = vmax.f32 %v803, %v722
        %v806 = vmax.f32 %v804, %v728
        %v807 = vmax.f32 %v805, %v734
        %v808 = vmax.f32 %v806, %v740
        %v809 = vmax.f32 %v807, %v808
        %v810 = vrot.slane %v809, 4
        %v811 = vmax.f32 %v809, %v810
        %v812 = vrot.slane %v811, 2
        %v813 = vmax.f32 %v811, %v812
        %v814 = vrot.slane %v813, 1
        %v815 = vmax.f32 %v813, %v814
        %v816 = vsub.f32 %v552, %v778
        %v817 = vsub.f32 %v554, %v815
        %v818 = vsub.f32 %v558, %v778
        %v819 = vsub.f32 %v560, %v815
        %v820 = vsub.f32 %v564, %v778
        %v821 = vsub.f32 %v566, %v815
        %v822 = vsub.f32 %v570, %v778
        %v823 = vsub.f32 %v572, %v815
        %v824 = vsub.f32 %v576, %v778
        %v825 = vsub.f32 %v578, %v815
        %v826 = vsub.f32 %v582, %v778
        %v827 = vsub.f32 %v584, %v815
        %v828 = vsub.f32 %v588, %v778
        %v829 = vsub.f32 %v590, %v815
        %v830 = vsub.f32 %v594, %v778
        %v831 = vsub.f32 %v596, %v815
        %v832 = vsub.f32 %v600, %v778
        %v833 = vsub.f32 %v602, %v815
        %v834 = vsub.f32 %v606, %v778
        %v835 = vsub.f32 %v608, %v815
        %v836 = vsub.f32 %v612, %v778
        %v837 = vsub.f32 %v614, %v815
        %v838 = vsub.f32 %v618, %v778
        %v839 = vsub.f32 %v620, %v815
        %v840 = vsub.f32 %v624, %v778
        %v841 = vsub.f32 %v626, %v815
        %v842 = vsub.f32 %v630, %v778
        %v843 = vsub.f32 %v632, %v815
        %v844 = vsub.f32 %v636, %v778
        %v845 = vsub.f32 %v638, %v815
        %v846 = vsub.f32 %v642, %v778
        %v847 = vsub.f32 %v644, %v815
        %v848 = vsub.f32 %v648, %v778
        %v849 = vsub.f32 %v650, %v815
        %v850 = vsub.f32 %v654, %v778
        %v851 = vsub.f32 %v656, %v815
        %v852 = vsub.f32 %v660, %v778
        %v853 = vsub.f32 %v662, %v815
        %v854 = vsub.f32 %v666, %v778
        %v855 = vsub.f32 %v668, %v815
        %v856 = vsub.f32 %v672, %v778
        %v857 = vsub.f32 %v674, %v815
        %v858 = vsub.f32 %v678, %v778
        %v859 = vsub.f32 %v680, %v815
        %v860 = vsub.f32 %v684, %v778
        %v861 = vsub.f32 %v686, %v815
        %v862 = vsub.f32 %v690, %v778
        %v863 = vsub.f32 %v692, %v815
        %v864 = vsub.f32 %v696, %v778
        %v865 = vsub.f32 %v698, %v815
        %v866 = vsub.f32 %v702, %v778
        %v867 = vsub.f32 %v704, %v815
        %v868 = vsub.f32 %v708, %v778
        %v869 = vsub.f32 %v710, %v815
        %v870 = vsub.f32 %v714, %v778
        %v871 = vsub.f32 %v716, %v815
        %v872 = vsub.f32 %v720, %v778
        %v873 = vsub.f32 %v722, %v815
        %v874 = vsub.f32 %v726, %v778
        %v875 = vsub.f32 %v728, %v815
        %v876 = vsub.f32 %v732, %v778
        %v877 = vsub.f32 %v734, %v815
        %v878 = vsub.f32 %v738, %v778
        %v879 = vsub.f32 %v740, %v815
        %v880 = vmul.f32 %v816, 1.442695
        %v881 = vpow.pop %v880
        %v882 = vmul.f32 %v817, 1.442695
        %v883 = vpow.pop %v882
        %v884 = vmul.f32 %v818, 1.442695
        %v885 = vpow.pop %v884
        %v886 = vmul.f32 %v819, 1.442695
        %v887 = vpow.pop %v886
        %v888 = vmul.f32 %v820, 1.442695
        %v889 = vpow.pop %v888
        %v890 = vmul.f32 %v821, 1.442695
        %v891 = vpow.pop %v890
        %v892 = vmul.f32 %v822, 1.442695
        %v893 = vpow.pop %v892
        %v894 = vmul.f32 %v823, 1.442695
        %v895 = vpow.pop %v894
        %v896 = vmul.f32 %v824, 1.442695
        %v897 = vpow.pop %v896
        %v898 = vmul.f32 %v825, 1.442695
        %v899 = vpow.pop %v898
        %v900 = vmul.f32 %v826, 1.442695
        %v901 = vpow.pop %v900
        %v902 = vmul.f32 %v827, 1.442695
        %v903 = vpow.pop %v902
        %v904 = vmul.f32 %v828, 1.442695
        %v905 = vpow.pop %v904
        %v906 = vmul.f32 %v829, 1.442695
        %v907 = vpow.pop %v906
        %v908 = vmul.f32 %v830, 1.442695
        %v909 = vpow.pop %v908
        %v910 = vmul.f32 %v831, 1.442695
        %v911 = vpow.pop %v910
        %v912 = vmul.f32 %v832, 1.442695
        %v913 = vpow.pop %v912
        %v914 = vmul.f32 %v833, 1.442695
        %v915 = vpow.pop %v914
        %v916 = vmul.f32 %v834, 1.442695
        %v917 = vpow.pop %v916
        %v918 = vmul.f32 %v835, 1.442695
        %v919 = vpow.pop %v918
        %v920 = vmul.f32 %v836, 1.442695
        %v921 = vpow.pop %v920
        %v922 = vmul.f32 %v837, 1.442695
        %v923 = vpow.pop %v922
        %v924 = vmul.f32 %v838, 1.442695
        %v925 = vpow.pop %v924
        %v926 = vmul.f32 %v839, 1.442695
        %v927 = vpow.pop %v926
        %v928 = vmul.f32 %v840, 1.442695
        %v929 = vpow.pop %v928
        %v930 = vmul.f32 %v841, 1.442695
        %v931 = vpow.pop %v930
        %v932 = vmul.f32 %v842, 1.442695
        %v933 = vpow.pop %v932
        %v934 = vmul.f32 %v843, 1.442695
        %v935 = vpow.pop %v934
        %v936 = vmul.f32 %v844, 1.442695
        %v937 = vpow.pop %v936
        %v938 = vmul.f32 %v845, 1.442695
        %v939 = vpow.pop %v938
        %v940 = vmul.f32 %v846, 1.442695
        %v941 = vpow.pop %v940
        %v942 = vmul.f32 %v847, 1.442695
        %v943 = vpow.pop %v942
        %v944 = vmul.f32 %v848, 1.442695
        %v945 = vpow.pop %v944
        %v946 = vmul.f32 %v849, 1.442695
        %v947 = vpow.pop %v946
        %v948 = vmul.f32 %v850, 1.442695
        %v949 = vpow.pop %v948
        %v950 = vmul.f32 %v851, 1.442695
        %v951 = vpow.pop %v950
        %v952 = vmul.f32 %v852, 1.442695
        %v953 = vpow.pop %v952
        %v954 = vmul.f32 %v853, 1.442695
        %v955 = vpow.pop %v954
        %v956 = vmul.f32 %v854, 1.442695
        %v957 = vpow.pop %v956
        %v958 = vmul.f32 %v855, 1.442695
        %v959 = vpow.pop %v958
        %v960 = vmul.f32 %v856, 1.442695
        %v961 = vpow.pop %v960
        %v962 = vmul.f32 %v857, 1.442695
        %v963 = vpow.pop %v962
        %v964 = vmul.f32 %v858, 1.442695
        %v965 = vpow.pop %v964
        %v966 = vmul.f32 %v859, 1.442695
        %v967 = vpow.pop %v966
        %v968 = vmul.f32 %v860, 1.442695
        %v969 = vpow.pop %v968
        %v970 = vmul.f32 %v861, 1.442695
        %v971 = vpow.pop %v970
        %v972 = vmul.f32 %v862, 1.442695
        %v973 = vpow.pop %v972
        %v974 = vmul.f32 %v863, 1.442695
        %v975 = vpow.pop %v974
        %v976 = vmul.f32 %v864, 1.442695
        %v977 = vpow.pop %v976
        %v978 = vmul.f32 %v865, 1.442695
        %v979 = vpow.pop %v978
        %v980 = vmul.f32 %v866, 1.442695
        %v981 = vpow.pop %v980
        %v982 = vmul.f32 %v867, 1.442695
        %v983 = vpow.pop %v982
        %v984 = vmul.f32 %v868, 1.442695
        %v985 = vpow.pop %v984
        %v986 = vmul.f32 %v869, 1.442695
        %v987 = vpow.pop %v986
        %v988 = vmul.f32 %v870, 1.442695
        %v989 = vpow.pop %v988
        %v990 = vmul.f32 %v871, 1.442695
        %v991 = vpow.pop %v990
        %v992 = vmul.f32 %v872, 1.442695
        %v993 = vpow.pop %v992
        %v994 = vmul.f32 %v873, 1.442695
        %v995 = vpow.pop %v994
        %v996 = vmul.f32 %v874, 1.442695
        %v997 = vpow.pop %v996
        %v998 = vmul.f32 %v875, 1.442695
        %v999 = vpow.pop %v998
        %v1000 = vmul.f32 %v876, 1.442695
        %v1001 = vpow.pop %v1000
        %v1002 = vmul.f32 %v877, 1.442695
        %v1003 = vpow.pop %v1002
        %v1004 = vmul.f32 %v878, 1.442695
        %v1005 = vpow.pop %v1004
        %v1006 = vmul.f32 %v879, 1.442695
        %v1007 = vpow.pop %v1006
        %v1008 = vadd.f32 %v881, %v885
        %v1009 = vadd.f32 %v1008, %v889
        %v1010 = vadd.f32 %v1009, %v893
        %v1011 = vadd.f32 %v1010, %v897
        %v1012 = vadd.f32 %v1011, %v901
        %v1013 = vadd.f32 %v1012, %v905
        %v1014 = vadd.f32 %v1013, %v909
        %v1015 = vadd.f32 %v1014, %v913
        %v1016 = vadd.f32 %v1015, %v917
        %v1017 = vadd.f32 %v1016, %v921
        %v1018 = vadd.f32 %v1017, %v925
        %v1019 = vadd.f32 %v1018, %v929
        %v1020 = vadd.f32 %v1019, %v933
        %v1021 = vadd.f32 %v1020, %v937
        %v1022 = vadd.f32 %v1021, %v941
        %v1023 = vadd.f32 %v1022, %v945
        %v1024 = vadd.f32 %v1023, %v949
        %v1025 = vadd.f32 %v1024, %v953
        %v1026 = vadd.f32 %v1025, %v957
        %v1027 = vadd.f32 %v1026, %v961
        %v1028 = vadd.f32 %v1027, %v965
        %v1029 = vadd.f32 %v1028, %v969
        %v1030 = vadd.f32 %v1029, %v973
        %v1031 = vadd.f32 %v1030, %v977
        %v1032 = vadd.f32 %v1031, %v981
        %v1033 = vadd.f32 %v1032, %v985
        %v1034 = vadd.f32 %v1033, %v989
        %v1035 = vadd.f32 %v1034, %v993
        %v1036 = vadd.f32 %v1035, %v997
        %v1037 = vadd.f32 %v1036, %v1001
        %v1038 = vadd.f32 %v1037, %v1005
        %v1039 = vrot.slane %v1038, 4
        %v1040 = vadd.f32 %v1038, %v1039
        %v1041 = vrot.slane %v1040, 2
        %v1042 = vadd.f32 %v1040, %v1041
        %v1043 = vrot.slane %v1042, 1
        %v1044 = vadd.f32 %v1042, %v1043
        %v1045 = vadd.f32 %v883, %v887
        %v1046 = vadd.f32 %v1045, %v891
        %v1047 = vadd.f32 %v1046, %v895
        %v1048 = vadd.f32 %v1047, %v899
        %v1049 = vadd.f32 %v1048, %v903
        %v1050 = vadd.f32 %v1049, %v907
        %v1051 = vadd.f32 %v1050, %v911
        %v1052 = vadd.f32 %v1051, %v915
        %v1053 = vadd.f32 %v1052, %v919
        %v1054 = vadd.f32 %v1053, %v923
        %v1055 = vadd.f32 %v1054, %v927
        %v1056 = vadd.f32 %v1055, %v931
        %v1057 = vadd.f32 %v1056, %v935
        %v1058 = vadd.f32 %v1057, %v939
        %v1059 = vadd.f32 %v1058, %v943
        %v1060 = vadd.f32 %v1059, %v947
        %v1061 = vadd.f32 %v1060, %v951
        %v1062 = vadd.f32 %v1061, %v955
        %v1063 = vadd.f32 %v1062, %v959
        %v1064 = vadd.f32 %v1063, %v963
        %v1065 = vadd.f32 %v1064, %v967
        %v1066 = vadd.f32 %v1065, %v971
        %v1067 = vadd.f32 %v1066, %v975
        %v1068 = vadd.f32 %v1067, %v979
        %v1069 = vadd.f32 %v1068, %v983
        %v1070 = vadd.f32 %v1069, %v987
        %v1071 = vadd.f32 %v1070, %v991
        %v1072 = vadd.f32 %v1071, %v995
        %v1073 = vadd.f32 %v1072, %v999
        %v1074 = vadd.f32 %v1073, %v1003
        %v1075 = vadd.f32 %v1074, %v1007
        %v1076 = vrot.slane %v1075, 4
        %v1077 = vadd.f32 %v1075, %v1076
        %v1078 = vrot.slane %v1077, 2
        %v1079 = vadd.f32 %v1077, %v1078
        %v1080 = vrot.slane %v1079, 1
        %v1081 = vadd.f32 %v1079, %v1080
        %v1082 = vrcp.pop %v1044
        %v1083 = vrcp.pop %v1081
        %v1084 = vmul.f32 %v881, %v1082
        %v1085 = vmul.f32 %v883, %v1083
        %v1086 = vmul.f32 %v885, %v1082
        %v1087 = vmul.f32 %v887, %v1083
        %v1088 = vmul.f32 %v889, %v1082
        %v1089 = vmul.f32 %v891, %v1083
        %v1090 = vmul.f32 %v893, %v1082
        %v1091 = vmul.f32 %v895, %v1083
        %v1092 = vmul.f32 %v897, %v1082
        %v1093 = vmul.f32 %v899, %v1083
        %v1094 = vmul.f32 %v901, %v1082
        %v1095 = vmul.f32 %v903, %v1083
        %v1096 = vmul.f32 %v905, %v1082
        %v1097 = vmul.f32 %v907, %v1083
        %v1098 = vmul.f32 %v909, %v1082
        %v1099 = vmul.f32 %v911, %v1083
        %v1100 = vmul.f32 %v913, %v1082
        %v1101 = vmul.f32 %v915, %v1083
        %v1102 = vmul.f32 %v917, %v1082
        %v1103 = vmul.f32 %v919, %v1083
        %v1104 = vmul.f32 %v921, %v1082
        %v1105 = vmul.f32 %v923, %v1083
        %v1106 = vmul.f32 %v925, %v1082
        %v1107 = vmul.f32 %v927, %v1083
        %v1108 = vmul.f32 %v929, %v1082
        %v1109 = vmul.f32 %v931, %v1083
        %v1110 = vmul.f32 %v933, %v1082
        %v1111 = vmul.f32 %v935, %v1083
        %v1112 = vmul.f32 %v937, %v1082
        %v1113 = vmul.f32 %v939, %v1083
        %v1114 = vmul.f32 %v941, %v1082
        %v1115 = vmul.f32 %v943, %v1083
        %v1116 = vmul.f32 %v945, %v1082
        %v1117 = vmul.f32 %v947, %v1083
        %v1118 = vmul.f32 %v949, %v1082
        %v1119 = vmul.f32 %v951, %v1083
        %v1120 = vmul.f32 %v953, %v1082
        %v1121 = vmul.f32 %v955, %v1083
        %v1122 = vmul.f32 %v957, %v1082
        %v1123 = vmul.f32 %v959, %v1083
        %v1124 = vmul.f32 %v961, %v1082
        %v1125 = vmul.f32 %v963, %v1083
        %v1126 = vmul.f32 %v965, %v1082
        %v1127 = vmul.f32 %v967, %v1083
        %v1128 = vmul.f32 %v969, %v1082
        %v1129 = vmul.f32 %v971, %v1083
        %v1130 = vmul.f32 %v973, %v1082
        %v1131 = vmul.f32 %v975, %v1083
        %v1132 = vmul.f32 %v977, %v1082
        %v1133 = vmul.f32 %v979, %v1083
        %v1134 = vmul.f32 %v981, %v1082
        %v1135 = vmul.f32 %v983, %v1083
        %v1136 = vmul.f32 %v985, %v1082
        %v1137 = vmul.f32 %v987, %v1083
        %v1138 = vmul.f32 %v989, %v1082
        %v1139 = vmul.f32 %v991, %v1083
        %v1140 = vmul.f32 %v993, %v1082
        %v1141 = vmul.f32 %v995, %v1083
        %v1142 = vmul.f32 %v997, %v1082
        %v1143 = vmul.f32 %v999, %v1083
        %v1144 = vmul.f32 %v1001, %v1082
        %v1145 = vmul.f32 %v1003, %v1083
        %v1146 = vmul.f32 %v1005, %v1082
        %v1147 = vmul.f32 %v1007, %v1083
        %v1148 = vld [vmem:[#allocation4] sm:$0xff]
        %v1150 = vcombine.high %v1148, %v1148
        %1152 = vmatprep.subr.mxu0 %v1085
        %1153 = vmatpush1.msra.mxu0 %v1084
        %1154 = vmatprep.subr.mxu0 %v1087
        %1155 = vmatpush1.msra.mxu0 %v1086
        %1156 = vmatprep.subr.mxu0 %v1089
        %1157 = vmatpush1.msra.mxu0 %v1088
        %1158 = vmatprep.subr.mxu0 %v1091
        %1159 = vmatpush1.msra.mxu0 %v1090
        %1160 = vmatprep.subr.mxu0 %v1093
        %1161 = vmatpush1.msra.mxu0 %v1092
        %1162 = vmatprep.subr.mxu0 %v1095
        %1163 = vmatpush1.msra.mxu0 %v1094
        %1164 = vmatprep.subr.mxu0 %v1097
        %1165 = vmatpush1.msra.mxu0 %v1096
        %1166 = vmatprep.subr.mxu0 %v1099
        %1167 = vmatpush1.msra.mxu0 %v1098
        %1168 = vmatprep.subr.mxu0 %v1101
        %1169 = vmatpush1.msra.mxu0 %v1100
        %1170 = vmatprep.subr.mxu0 %v1103
        %1171 = vmatpush1.msra.mxu0 %v1102
        %1172 = vmatprep.subr.mxu0 %v1105
        %1173 = vmatpush1.msra.mxu0 %v1104
        %1174 = vmatprep.subr.mxu0 %v1107
        %1175 = vmatpush1.msra.mxu0 %v1106
        %1176 = vmatprep.subr.mxu0 %v1109
        %1177 = vmatpush1.msra.mxu0 %v1108
        %1178 = vmatprep.subr.mxu0 %v1111
        %1179 = vmatpush1.msra.mxu0 %v1110
        %1180 = vmatprep.subr.mxu0 %v1113
        %1181 = vmatpush1.msra.mxu0 %v1112
        %1182 = vmatprep.subr.mxu0 %v1115
        %1183 = vmatpush1.msra.mxu0 %v1114
        %1184 = vmatprep.subr.mxu0 %v1117
        %1185 = vmatpush1.msra.mxu0 %v1116
        %1186 = vmatprep.subr.mxu0 %v1119
        %1187 = vmatpush1.msra.mxu0 %v1118
        %1188 = vmatprep.subr.mxu0 %v1121
        %1189 = vmatpush1.msra.mxu0 %v1120
        %1190 = vmatprep.subr.mxu0 %v1123
        %1191 = vmatpush1.msra.mxu0 %v1122
        %1192 = vmatprep.subr.mxu0 %v1125
        %1193 = vmatpush1.msra.mxu0 %v1124
        %1194 = vmatprep.subr.mxu0 %v1127
        %1195 = vmatpush1.msra.mxu0 %v1126
        %1196 = vmatprep.subr.mxu0 %v1129
        %1197 = vmatpush1.msra.mxu0 %v1128
        %1198 = vmatprep.subr.mxu0 %v1131
        %1199 = vmatpush1.msra.mxu0 %v1130
        %1200 = vmatprep.subr.mxu0 %v1133
        %1201 = vmatpush1.msra.mxu0 %v1132
        %1202 = vmatprep.subr.mxu0 %v1135
        %1203 = vmatpush1.msra.mxu0 %v1134
        %1204 = vmatprep.subr.mxu0 %v1137
        %1205 = vmatpush1.msra.mxu0 %v1136
        %1206 = vmatprep.subr.mxu0 %v1139
        %1207 = vmatpush1.msra.mxu0 %v1138
        %1208 = vmatprep.subr.mxu0 %v1141
        %1209 = vmatpush1.msra.mxu0 %v1140
        %1210 = vmatprep.subr.mxu0 %v1143
        %1211 = vmatpush1.msra.mxu0 %v1142
        %1212 = vmatprep.subr.mxu0 %v1145
        %1213 = vmatpush1.msra.mxu0 %v1144
        %1214 = vmatprep.subr.mxu0 %v1147
        %1215 = vmatpush1.msra.mxu0 %v1146
        %1216 = vmatprep.mubr.f32.mxu0 %v1150
        %1217 = vmatmul.mubr.f32.gmra.mrb[0].mxu0 %v1148
        %v1218 = vpop.f32.mrb[0].mxu0
        %v1219 = vadd.f32 0.0, %v1218
        %v1220 = vpop.f32.mrb[0].mxu0
        %v1221 = vadd.f32 0.0, %v1220
        %1222 = vdwg.mxu0
        %v1225 = vcombine.low %v1219, %v1221
        %1227 = vst [vmem:[%s177] sm:$0xff] %v1225
        %s1228 = sand.u32 %s107, 1
        %s1229 = scalar_lea.sflag [#allocation6], %s1228
        %s1230 = sand.u32 %s107, 1
        %s1231 = smul.addr %s1230, 8
        %s1232 = scalar_lea.vmem [#allocation5], %s1231
        // Predicated region
        $region37: #{tpu_custom_call.1} parent=31 // pred_check
          %p1233 = pneg %p117
        $region38: #{tpu_custom_call.1} parent=31 // pred_check_branch
          %1235 = sbr.rel (%p1233) target = $region40
        $region39: #{tpu_custom_call.1} parent=31 // pred_region
          %s1236 = smul.u32 2, %s22
          %s1238 = ssub.s32 128, 128
          %1239 = vsyncadd %s1229, %s1238
          %s1240 = smul.addr %s21, 2
          %s1241 = sadd.s32 %s1236, %s1240
          %s1242 = smul.addr %s1241, 64
          %s1243 = scalar_lea.hbm %s3, %s1242
          %s1245 = sshll.u32 %s1232, 4
          %s1246 = int_to_ptr.vmem [resolvable:$true] %s1245
          %1248 = dma.vmem_to_hbm [thread:$0]  %s1246, 128, %s1243, %s1229
        $region40: #{tpu_custom_call.1} parent=31 // pred_fallthru
          _
      $region32: #{tpu_custom_call.1} parent=5 // pred_fallthru
        _
      %p1249 = scmp.le.s32.totalorder 2, %s12
      // Predicated region
      $region41: #{tpu_custom_call.1} parent=5 // pred_check
        %p1250 = pneg %p1249
      $region42: #{tpu_custom_call.1} parent=5 // pred_check_branch
        %1252 = sbr.rel (%p1250) target = $region44
      $region43: #{tpu_custom_call.1} parent=5 // pred_region
        %s1253 = ssub.s32 %s12, 2
        // Predicated region
        $region45: #{tpu_custom_call.1} parent=43 // pred_check
          %p1254 = pneg %p123
        $region46: #{tpu_custom_call.1} parent=43 // pred_check_branch
          %1256 = sbr.rel (%p1254) target = $region48
        $region47: #{tpu_custom_call.1} parent=43 // pred_region
          %s1257 = sand.u32 %s108, 1
          %s1258 = scalar_lea.sflag [#allocation6], %s1257
          %s1259 = sand.u32 %s108, 1
          %s1260 = smul.addr %s1259, 8
          %s1261 = scalar_lea.vmem [#allocation5], %s1260
          %1262 = dma.done %s1258, 128
        $region48: #{tpu_custom_call.1} parent=43 // pred_fallthru
          _
      $region44: #{tpu_custom_call.1} parent=5 // pred_fallthru
        _
    $region6: #{tpu_custom_call.1} parent=1 // loop_footer
      %s16 = sadd.s32 1, %s12
    $region7: #{tpu_custom_call.1} parent=1 // loop_footer_branch
      %11 = sbr.rel target = $region3
    $region8: #{tpu_custom_call.1} parent=1 // loop_exit
      _
    %1263 = vsyncpa [#allocation6], 1
    %s1264 = scalar_lea.sflag [#allocation6], 1
    %1265 = vsyncpa %s1264, 1

</llo_original>
